<compile_context>
chip_gen: v7x
topology: tpu7x:2x2x1
jax: 0.10.0
libtpu: 0.0.40
codegen_flags: <defaults>
</compile_context>

<pallas_src>
from functools import partial

import jax
import jax.numpy as jnp
from jax import lax
from jax.experimental import pallas as pl
from jax.experimental.pallas import tpu as pltpu


def _conv1d_bn_kernel(*refs, K, pad, T, eps, has_halo):
    """Fused 1-D cross-correlation (single 1x1xK filter) + BatchNorm1d (train).

    refs (has_halo=True):  w(SMEM f32[K]), xl(B,128), xc(B,T), xr(B,128),
                           gamma(1,T), beta(1,T), out(B,T)
    refs (has_halo=False): w(SMEM f32[K]), xc(B,T), gamma(1,T), beta(1,T), out(B,T)
    """
    if has_halo:
        w_ref, xl_ref, xc_ref, xr_ref, g_ref, b_ref, o_ref = refs
    else:
        w_ref, xc_ref, g_ref, b_ref, o_ref = refs
        xl_ref = xr_ref = None

    B = o_ref.shape[0]
    i = pl.program_id(0)
    nblk = pl.num_programs(0)

    # Cast to f32 in-kernel (v5e has no bf16 VALU; BN stats must be f32 anyway).
    xc = xc_ref[...].astype(jnp.float32)                      # (B, T)

    # Hoist the K tap-weight SMEM reads out of the unrolled loop.
    w = [w_ref[k] for k in range(K)]

    if has_halo:
        # 128-lane halo blocks. The clamped fetches at the sequence edges are
        # zeroed here once, which implements the conv's virtual zero padding —
        # no per-tap full-width validity masks are needed anywhere.
        left_ok = (i > 0).astype(jnp.float32)
        right_ok = (i < nblk - 1).astype(jnp.float32)
        xl = xl_ref[...].astype(jnp.float32) * left_ok         # (B, 128)
        xr = xr_ref[...].astype(jnp.float32) * right_ok        # (B, 128)
        lane128 = lax.broadcasted_iota(jnp.int32, (1, 128), 1)
    else:
        lane_full = lax.broadcasted_iota(jnp.int32, (1, T), 1)

    acc = w[pad] * xc                                          # centre tap
    for k in range(K):
        d = k - pad                                            # output[j] += w[k]*x[j+d]
        if d == 0:
            continue
        # XLU roll: rc[:, j] = xc[:, (j + d) mod T]
        rc = pltpu.roll(xc, shift=(-d) % T, axis=1)
        if has_halo:
            if d < 0:
                s = -d                                         # 1 <= s <= pad <= 128
                nb = pltpu.roll(xl, shift=s % 128, axis=1)     # nb[:, j] = xl[:, 128-s+j]
                head = jnp.where(lane128 < s, nb, rc[:, :128])
                tap = head if T == 128 else jnp.concatenate([head, rc[:, 128:]], axis=1)
            else:
                nb = pltpu.roll(xr, shift=(-d) % 128, axis=1)  # nb[:, j] = xr[:, j-128+d]
                tail = jnp.where(lane128 >= 128 - d, nb, rc[:, T - 128:])
                tap = tail if T == 128 else jnp.concatenate([rc[:, :T - 128], tail], axis=1)
        else:
            # Single-tile path: zero the wrapped lanes (virtual conv padding).
            mask = (lane_full >= -d) if d < 0 else (lane_full < T - d)
            tap = jnp.where(mask, rc, 0.0)
        acc = acc + w[k] * tap

    # BatchNorm1d, training mode: per-feature batch mean / biased variance over
    # the (un-tiled) batch axis; affine folded into one scale-and-shift.
    mean = jnp.mean(acc, axis=0, keepdims=True)                # (1, T)
    var = jnp.mean((acc - mean) ** 2, axis=0, keepdims=True)   # (1, T), biased
    scale = lax.rsqrt(var + eps) * g_ref[...]                  # (1, T)
    shift = b_ref[...] - mean * scale                          # (1, T)

    # Dropout(p=0) is identity.
    o_ref[...] = (acc * scale + shift).astype(o_ref.dtype)


def _choose_tile_l(L, B, in_bytes, out_bytes, pad):
    """Feature-axis tile: a multiple of 128 that divides L, sized for MiB-scale
    double-buffered tiles (amortizes the ~0.35us per-grid-step overhead, keeps
    stores lane-dense) while fitting the 32 MiB scoped-VMEM limit we request
    (safe on v5e/v6e 128 MiB and v7x 64 MiB physical VMEM). Prefers >= 2 tiles
    for large L so the parallel grid axis can shard across v7x's two TCs."""
    if L % 128 != 0 or pad > 128:
        # TODO(synk): huge L not divisible by 128 falls back to one full-width
        # block and could exceed the VMEM budget; would need masked partial tiles.
        return L
    # dbuf'd x + out tiles, f32 temporaries, dbuf'd gamma/beta — bytes per lane.
    per_lane = 2 * B * in_bytes + 2 * B * out_bytes + 12 * B + 16
    if L <= 4096 and L * per_lane <= (24 << 20):
        return L                                   # small problem: one block, no grid overhead
    cap = min((12 << 20) // per_lane, 32768, L // 2)
    cap = max((cap // 128) * 128, 128)
    n = L // 128
    best, f = 1, 1
    while f * f <= n:                              # largest 128-multiple divisor of L <= cap
        if n % f == 0:
            if f * 128 <= cap and f > best:
                best = f
            if (n // f) * 128 <= cap and (n // f) > best:
                best = n // f
        f += 1
    return best * 128


def conv1d_block_forward(x, weight, gamma, beta, *, eps=1e-5, tile_l=None):
    """x: [B, L] (f32 or bf16); weight: [K] (or [1,1,K]); gamma/beta: [L].
    Returns [B, L] in x.dtype."""
    assert x.ndim == 2
    B, L = x.shape
    weight = jnp.asarray(weight, jnp.float32).reshape(-1)
    K = weight.shape[0]
    # Odd K keeps n_out == in_dim; even K would break BatchNorm1d(block_out_dim)
    # in the original module as well.
    assert K % 2 == 1, "kernel_size must be odd (matches BatchNorm1d(out_dim))"
    pad = (K - 1) // 2
    assert pad <= 128, "kernel_size > 257 not supported by the 128-lane halo"

    in_bytes = jnp.dtype(x.dtype).itemsize
    out_bytes = in_bytes                       # output keeps the input dtype

    if tile_l is None:
        tile_l = _choose_tile_l(L, B, in_bytes, out_bytes, pad)
    assert tile_l == L or (tile_l % 128 == 0 and L % tile_l == 0), \
        "tile_l must be L or a multiple of 128 dividing L"
    nblk = L // tile_l
    has_halo = nblk > 1

    gamma2 = jnp.asarray(gamma, jnp.float32).reshape(1, L)
    beta2 = jnp.asarray(beta, jnp.float32).reshape(1, L)

    kern = partial(_conv1d_bn_kernel, K=K, pad=pad, T=tile_l, eps=float(eps),
                   has_halo=has_halo)

    if has_halo:
        bpt = tile_l // 128                    # 128-lane blocks per tile
        n128 = L // 128
        x_specs = [
            # left halo: last 128-lane block of the previous tile (clamped at edge)
            pl.BlockSpec((B, 128), lambda i, bpt=bpt: (0, jnp.maximum(i * bpt - 1, 0))),
            # centre tile
            pl.BlockSpec((B, tile_l), lambda i: (0, i)),
            # right halo: first 128-lane block of the next tile (clamped at edge)
            pl.BlockSpec((B, 128),
                         lambda i, bpt=bpt, last=n128 - 1: (0, jnp.minimum((i + 1) * bpt, last))),
        ]
        x_args = (x, x, x)
    else:
        x_specs = [pl.BlockSpec((B, tile_l), lambda i: (0, i))]
        x_args = (x,)

    grid_spec = pltpu.PrefetchScalarGridSpec(
        num_scalar_prefetch=0,
        grid=(nblk,),
        in_specs=(
            # conv taps: a handful of f32 scalars, live in SMEM.
            [pl.BlockSpec(memory_space=pltpu.MemorySpace.SMEM)]
            + x_specs
            + [pl.BlockSpec((1, tile_l), lambda i: (0, i)),    # gamma
               pl.BlockSpec((1, tile_l), lambda i: (0, i))]    # beta
        ),
        out_specs=pl.BlockSpec((B, tile_l), lambda i: (0, i)),
    )

    return pl.pallas_call(
        kern,
        out_shape=jax.ShapeDtypeStruct((B, L), x.dtype),
        grid_spec=grid_spec,
        compiler_params=pltpu.CompilerParams(
            # L-tiles are independent (BN stats are per-feature over the whole,
            # un-tiled batch) -> both v7x TensorCores can take a share.
            dimension_semantics=("parallel",),
            # Raise v5e's 16 MiB scoped default; 32 MiB is within scoped/physical
            # VMEM on v5e/v6e (128 MiB) and v7x (64 MiB).
            vmem_limit_bytes=32 * 1024 * 1024,
        ),
    )(weight, *x_args, gamma2, beta2)


def _reference(x, weight, gamma, beta, kernel_size, eps=1e-5):
    """Pure-JAX reference matching F.conv1d + BatchNorm1d(train) + Dropout(0)."""
    pad = (kernel_size - 1) // 2
    y = lax.conv_general_dilated(
        x[:, None, :], jnp.asarray(weight, jnp.float32).reshape(1, 1, kernel_size),
        window_strides=(1,), padding=[(pad, pad)],
        dimension_numbers=("NCH", "OIH", "NCH"),
    )[:, 0, :]
    m = y.mean(axis=0, keepdims=True)
    v = ((y - m) ** 2).mean(axis=0, keepdims=True)
    return (y - m) / jnp.sqrt(v + eps) * gamma[None, :] + beta[None, :]


if __name__ == "__main__":
    # Module settings: block_in_dim = block_out_dim = 256, use_bn=True, dropout=0.
    batch, in_dim, kernel_size = 8, 256, 3

    key = jax.random.PRNGKey(0)
    k_x, k_w, k_g, k_b, k_x2, k_w2, k_g2, k_b2 = jax.random.split(key, 8)
    x = jax.random.normal(k_x, (batch, in_dim), dtype=jnp.float32)
    # nn.Parameter(torch.randn(1, 1, K)) -> deterministic synthetic taps.
    weight = jax.random.normal(k_w, (kernel_size,), dtype=jnp.float32)
    gamma = jax.random.normal(k_g, (in_dim,), dtype=jnp.float32)
    beta = jax.random.normal(k_b, (in_dim,), dtype=jnp.float32)

    ref = _reference(x, weight, gamma, beta, kernel_size)

    # 1) Auto-tiled path (small L -> one full-width block).
    out = jax.block_until_ready(conv1d_block_forward(x, weight, gamma, beta))
    assert out.shape == (batch, in_dim)
    assert jnp.allclose(out, ref, atol=1e-4, rtol=1e-4), "auto-tile mismatch"

    # 2) Forced multi-tile path (tile_l=128) to exercise the 128-lane halo stitch.
    out_t = jax.block_until_ready(conv1d_block_forward(x, weight, gamma, beta, tile_l=128))
    assert jnp.allclose(out_t, ref, atol=1e-4, rtol=1e-4), "halo-tile mismatch"

    # 3) bf16 input stays bf16 across the boundary (f32 accumulation in-kernel).
    x_bf16 = x.astype(jnp.bfloat16)
    ref_b = _reference(x_bf16.astype(jnp.float32), weight, gamma, beta, kernel_size)
    out_b = jax.block_until_ready(conv1d_block_forward(x_bf16, weight, gamma, beta, tile_l=128))
    assert out_b.dtype == jnp.bfloat16
    assert jnp.allclose(out_b.astype(jnp.float32), ref_b, atol=3e-2, rtol=3e-2), "bf16 mismatch"

    # 4) Wider tiles (T > 128) and K=5 exercise the concat stitch and |d|=2 taps.
    in_dim2, ks2 = 512, 5
    x2 = jax.random.normal(k_x2, (batch, in_dim2), dtype=jnp.float32)
    w2 = jax.random.normal(k_w2, (ks2,), dtype=jnp.float32)
    g2 = jax.random.normal(k_g2, (in_dim2,), dtype=jnp.float32)
    b2 = jax.random.normal(k_b2, (in_dim2,), dtype=jnp.float32)
    ref2 = _reference(x2, w2, g2, b2, ks2)
    out2 = jax.block_until_ready(conv1d_block_forward(x2, w2, g2, b2, tile_l=256))
    assert jnp.allclose(out2, ref2, atol=1e-4, rtol=1e-4), "wide-tile mismatch"

    print("KERNEL_OK")
</pallas_src>

<mosaic_0001>
module attributes {stable_mosaic.version = 11 : i64} {
  func.func @_conv1d_bn_kernel(%arg0: i32, %arg1: memref<3xf32, #tpu.memory_space<smem>>, %arg2: memref<8x256xf32, #tpu.memory_space<vmem>>, %arg3: memref<1x256xf32, #tpu.memory_space<vmem>>, %arg4: memref<1x256xf32, #tpu.memory_space<vmem>>, %arg5: memref<8x256xf32, #tpu.memory_space<vmem>>) attributes {dimension_semantics = [#tpu.dimension_semantics<parallel>], iteration_bounds = array<i64: 1>, scalar_prefetch = 0 : i64, scratch_operands = 0 : i64, tpu.core_type = #tpu.core_type<tc>, window_params = [{transform_indices = @transform_0, window_bounds = array<i64: 3>}, {transform_indices = @transform_1, window_bounds = array<i64: 8, 256>}, {transform_indices = @transform_2, window_bounds = array<i64: 1, 256>}, {transform_indices = @transform_3, window_bounds = array<i64: 1, 256>}, {transform_indices = @transform_4, window_bounds = array<i64: 8, 256>}]} {
    %c0 = arith.constant 0 : index
    %c0_0 = arith.constant 0 : index
    %0 = vector.load %arg2[%c0, %c0_0] : memref<8x256xf32, #tpu.memory_space<vmem>>, vector<8x256xf32>
    %c0_1 = arith.constant 0 : index
    %1 = memref.load %arg1[%c0_1] : memref<3xf32, #tpu.memory_space<smem>>
    %c1 = arith.constant 1 : index
    %2 = memref.load %arg1[%c1] : memref<3xf32, #tpu.memory_space<smem>>
    %c2 = arith.constant 2 : index
    %3 = memref.load %arg1[%c2] : memref<3xf32, #tpu.memory_space<smem>>
    %4 = tpu.iota {dimensions = array<i32: 1>} : vector<1x256xi32>
    %5 = vector.broadcast %2 : f32 to vector<8x256xf32>
    %6 = arith.mulf %5, %0 : vector<8x256xf32>
    %c1_i32 = arith.constant 1 : i32
    %7 = tpu.dynamic_rotate %0 by %c1_i32 dim 1 : vector<8x256xf32>, i32 -> vector<8x256xf32>
    %c1_i32_2 = arith.constant 1 : i32
    %8 = vector.broadcast %c1_i32_2 : i32 to vector<1x256xi32>
    %9 = arith.cmpi sge, %4, %8 : vector<1x256xi32>
    %cst = arith.constant 0.000000e+00 : f32
    %10 = vector.shape_cast %9 : vector<1x256xi1> to vector<1x256xi1>
    %11 = vector.broadcast %10 : vector<1x256xi1> to vector<8x256xi1>
    %12 = vector.broadcast %cst : f32 to vector<8x256xf32>
    %13 = arith.select %11, %7, %12 : vector<8x256xi1>, vector<8x256xf32>
    %14 = vector.broadcast %1 : f32 to vector<8x256xf32>
    %15 = arith.mulf %14, %13 : vector<8x256xf32>
    %16 = arith.addf %6, %15 : vector<8x256xf32>
    %c255_i32 = arith.constant 255 : i32
    %17 = tpu.dynamic_rotate %0 by %c255_i32 dim 1 : vector<8x256xf32>, i32 -> vector<8x256xf32>
    %c255_i32_3 = arith.constant 255 : i32
    %18 = vector.broadcast %c255_i32_3 : i32 to vector<1x256xi32>
    %19 = arith.cmpi slt, %4, %18 : vector<1x256xi32>
    %cst_4 = arith.constant 0.000000e+00 : f32
    %20 = vector.shape_cast %19 : vector<1x256xi1> to vector<1x256xi1>
    %21 = vector.broadcast %20 : vector<1x256xi1> to vector<8x256xi1>
    %22 = vector.broadcast %cst_4 : f32 to vector<8x256xf32>
    %23 = arith.select %21, %17, %22 : vector<8x256xi1>, vector<8x256xf32>
    %24 = vector.broadcast %3 : f32 to vector<8x256xf32>
    %25 = arith.mulf %24, %23 : vector<8x256xf32>
    %26 = arith.addf %16, %25 : vector<8x256xf32>
    %cst_5 = arith.constant dense<0.000000e+00> : vector<256xf32>
    %27 = vector.multi_reduction <add>, %26, %cst_5 [0] : vector<8x256xf32> to vector<256xf32>
    %28 = vector.shape_cast %27 : vector<256xf32> to vector<1x256xf32>
    %cst_6 = arith.constant 8.000000e+00 : f32
    %29 = vector.broadcast %cst_6 : f32 to vector<1x256xf32>
    %30 = arith.divf %28, %29 : vector<1x256xf32>
    %31 = vector.broadcast %30 : vector<1x256xf32> to vector<8x256xf32>
    %32 = arith.subf %26, %31 : vector<8x256xf32>
    %33 = arith.mulf %32, %32 : vector<8x256xf32>
    %cst_7 = arith.constant dense<0.000000e+00> : vector<256xf32>
    %34 = vector.multi_reduction <add>, %33, %cst_7 [0] : vector<8x256xf32> to vector<256xf32>
    %35 = vector.shape_cast %34 : vector<256xf32> to vector<1x256xf32>
    %cst_8 = arith.constant 8.000000e+00 : f32
    %36 = vector.broadcast %cst_8 : f32 to vector<1x256xf32>
    %37 = arith.divf %35, %36 : vector<1x256xf32>
    %cst_9 = arith.constant 9.99999974E-6 : f32
    %38 = vector.broadcast %cst_9 : f32 to vector<1x256xf32>
    %39 = arith.addf %37, %38 : vector<1x256xf32>
    %40 = math.rsqrt %39 : vector<1x256xf32>
    %c0_10 = arith.constant 0 : index
    %c0_11 = arith.constant 0 : index
    %41 = vector.load %arg3[%c0_10, %c0_11] : memref<1x256xf32, #tpu.memory_space<vmem>>, vector<1x256xf32>
    %42 = arith.mulf %40, %41 : vector<1x256xf32>
    %c0_12 = arith.constant 0 : index
    %c0_13 = arith.constant 0 : index
    %43 = vector.load %arg4[%c0_12, %c0_13] : memref<1x256xf32, #tpu.memory_space<vmem>>, vector<1x256xf32>
    %44 = arith.mulf %30, %42 : vector<1x256xf32>
    %45 = arith.subf %43, %44 : vector<1x256xf32>
    %46 = vector.broadcast %42 : vector<1x256xf32> to vector<8x256xf32>
    %47 = arith.mulf %26, %46 : vector<8x256xf32>
    %48 = vector.broadcast %45 : vector<1x256xf32> to vector<8x256xf32>
    %49 = arith.addf %47, %48 : vector<8x256xf32>
    %c0_14 = arith.constant 0 : index
    %c0_15 = arith.constant 0 : index
    %50 = vector.load %arg5[%c0_14, %c0_15] : memref<8x256xf32, #tpu.memory_space<vmem>>, vector<8x256xf32>
    tpu.vector_store %arg5[%c0_14, %c0_15], %49 {strides = array<i32>} : memref<8x256xf32, #tpu.memory_space<vmem>>, vector<8x256xf32>,
    return
  }
  func.func @transform_0(%arg0: i32) -> i32 {
    %c0_i32 = arith.constant 0 : i32
    %c0_i32_0 = arith.constant 0 : i32
    return %c0_i32 : i32
  }
  func.func @transform_1(%arg0: i32) -> (i32, i32) {
    %c0_i32 = arith.constant 0 : i32
    %c0_i32_0 = arith.constant 0 : i32
    return %c0_i32, %arg0 : i32, i32
  }
  func.func @transform_2(%arg0: i32) -> (i32, i32) {
    %c0_i32 = arith.constant 0 : i32
    %c0_i32_0 = arith.constant 0 : i32
    return %c0_i32, %arg0 : i32, i32
  }
  func.func @transform_3(%arg0: i32) -> (i32, i32) {
    %c0_i32 = arith.constant 0 : i32
    %c0_i32_0 = arith.constant 0 : i32
    return %c0_i32, %arg0 : i32, i32
  }
  func.func @transform_4(%arg0: i32) -> (i32, i32) {
    %c0_i32 = arith.constant 0 : i32
    %c0_i32_0 = arith.constant 0 : i32
    return %c0_i32, %arg0 : i32, i32
  }
}

</mosaic_0001>

<llo_original>
// kernel: tpu_custom_call.1
$region0: #{tpu_custom_call.1}
  #allocation0 [shape = 'u32[]', space=smem, size = 0x4, offset = 0x4, fixed_abs, tag = 'smem constant byte address 0x4 - core index']
  #allocation1 [shape = 'u32[144,128]{1,0:T(1,128)}', space=vmem, size = 0x12000, scoped, tag = 'internal scratch']
  %s0 = inlined_call_operand.hbm [shape: f32[3], index: 0, kind: input, shape index: {}]
  %s1 = inlined_call_operand.hbm [shape: f32[8,256], index: 1, kind: input, shape index: {}]
  %s2 = inlined_call_operand.vmem [shape: f32[1,256], index: 2, kind: input, shape index: {}]
  %s3 = inlined_call_operand.vmem [shape: f32[1,256], index: 3, kind: input, shape index: {}]
  %s4 = inlined_call_operand.hbm [shape: f32[8,256], index: 4, kind: output, shape index: {}]
  %s5 = sld [smem:[#allocation0]]
  $region34: #{tpu_custom_call.1} parent=0
    _
  %s7 = ssub.s32 1, %s5
  %s8 = scalar_select 0, %s7, %s5
  $region1: #{tpu_custom_call.1} parent=0
    #allocation2 [shape = 'u8[512]{0}', space=smem, size = 0x200, scoped, tag = 'input window, operand 0, single buffered']
    #allocation3 [shape = 's32[1]{0}', space=sflag, size = 0x4, scoped, tag = 'scoped memory for tpu_custom_call.1']
    #allocation4 [shape = 's32[1]{0}', space=sflag, size = 0x4, scoped, tag = 'scoped memory for tpu_custom_call.1']
    #allocation5 [shape = 's32[1]{0}', space=sflag, size = 0x4, scoped, tag = 'scoped memory for tpu_custom_call.1']
    #allocation6 [shape = 'u8[8192]{0}', space=vmem, size = 0x2000, scoped, tag = 'input window, operand 1, single buffered']
    #allocation7 [shape = 'u8[8192]{0}', space=vmem, size = 0x2000, scoped, tag = 'output window, operand 0, single buffered']
    %9 = vsyncpa [#allocation5], 0
    %10 = vsyncpa [#allocation3], 0
    %11 = vsyncpa [#allocation4], 0
    // Predicated region
    $region2: #{tpu_custom_call.1} parent=1 // pred_check
      _
    $region3: #{tpu_custom_call.1} parent=1 // pred_check_branch
      %13 = sbr.rel (0) target = $region5
    $region4: #{tpu_custom_call.1} parent=1 // pred_region
      %s15 = ssub.s32 16, 16
      %16 = vsyncadd [#allocation5], %s15
      %19 = dma.hbm_to_smem %s0, 16, [#allocation2], [#allocation5]
    $region5: #{tpu_custom_call.1} parent=1 // pred_fallthru
      _
    // Predicated region
    $region6: #{tpu_custom_call.1} parent=1 // pred_check
      _
    $region7: #{tpu_custom_call.1} parent=1 // pred_check_branch
      %21 = sbr.rel (0) target = $region9
    $region8: #{tpu_custom_call.1} parent=1 // pred_region
      %s23 = ssub.s32 256, 256
      %24 = vsyncadd [#allocation3], %s23
      %s26 = sshll.u32 [#allocation6], 4
      %s27 = int_to_ptr.vmem [resolvable:$true] %s26
      %29 = dma.hbm_to_vmem [thread:$0]  %s1, 256, %s27, [#allocation3]
    $region9: #{tpu_custom_call.1} parent=1 // pred_fallthru
      _
    // Predicated region
    $region10: #{tpu_custom_call.1} parent=1 // pred_check
      _
    $region11: #{tpu_custom_call.1} parent=1 // pred_check_branch
      %31 = sbr.rel (0) target = $region13
    $region12: #{tpu_custom_call.1} parent=1 // pred_region
      _
    $region13: #{tpu_custom_call.1} parent=1 // pred_fallthru
      _
    // Predicated region
    $region14: #{tpu_custom_call.1} parent=1 // pred_check
      _
    $region15: #{tpu_custom_call.1} parent=1 // pred_check_branch
      %33 = sbr.rel (0) target = $region17
    $region16: #{tpu_custom_call.1} parent=1 // pred_region
      _
    $region17: #{tpu_custom_call.1} parent=1 // pred_fallthru
      _
    // Predicated region
    $region18: #{tpu_custom_call.1} parent=1 // pred_check
      _
    $region19: #{tpu_custom_call.1} parent=1 // pred_check_branch
      %35 = sbr.rel (0) target = $region21
    $region20: #{tpu_custom_call.1} parent=1 // pred_region
      %36 = dma.done [#allocation5], 16
    $region21: #{tpu_custom_call.1} parent=1 // pred_fallthru
      _
    // Predicated region
    $region22: #{tpu_custom_call.1} parent=1 // pred_check
      _
    $region23: #{tpu_custom_call.1} parent=1 // pred_check_branch
      %38 = sbr.rel (0) target = $region25
    $region24: #{tpu_custom_call.1} parent=1 // pred_region
      %39 = dma.done [#allocation3], 256
    $region25: #{tpu_custom_call.1} parent=1 // pred_fallthru
      _
    %40 = sfence
    %v41 = vld [vmem:[#allocation6] sm:$0xff]
    %v42 = vld [vmem:[#allocation6 + $0x8] sm:$0xff]
    %s43 = sld [smem:[#allocation2]]
    %s44 = sld [smem:[#allocation2 + $0x1]]
    %s45 = sld [smem:[#allocation2 + $0x2]]
    %v46 = vlaneseq
    %v47 = vand.u32 %v46, 127
    %v48 = vadd.s32 %v47, 128
    %v49 = vstv %s44
    %v50 = vmul.f32 %v49, %v41
    %v51 = vmul.f32 %v49, %v42
    %52 = vrot.lane.b32.xlu0 %v41, 1
    %v53 = vpop.permute.xlu0 %52
    %54 = vrot.lane.b32.xlu0 %v42, 1
    %v55 = vpop.permute.xlu0 %54
    %vm56 = vcmp.lt.s32.totalorder %v47, 1
    %v57 = vsel %vm56, %v53, %v55
    %v58 = vsel %vm56, %v55, %v53
    %vm59 = vcmp.ge.s32.totalorder %v47, 1
    %vm60 = vcmp.ge.s32.totalorder %v48, 1
    %v61 = vsel %vm59, 1, 0
    %v62 = vsel %vm60, 1, 0
    %vm63 = vcmp.eq.s32.totalorder %v61, 1
    %vm64 = vcmp.eq.s32.totalorder %v62, 1
    %v65 = vsel %vm63, %v58, 0.0
    %v66 = vsel %vm64, %v57, 0.0
    %v67 = vstv %s43
    %v68 = vmul.f32 %v67, %v65
    %v69 = vmul.f32 %v67, %v66
    %v70 = vadd.f32 %v50, %v68
    %v71 = vadd.f32 %v51, %v69
    %72 = vrot.lane.b32.xlu0 %v41, 127
    %v73 = vpop.permute.xlu0 %72
    %74 = vrot.lane.b32.xlu0 %v42, 127
    %v75 = vpop.permute.xlu0 %74
    %vm76 = vcmp.lt.s32.totalorder %v47, 127
    %v77 = vsel %vm76, %v73, %v75
    %v78 = vsel %vm76, %v75, %v73
    %vm79 = vcmp.lt.s32.totalorder %v47, 255
    %vm80 = vcmp.lt.s32.totalorder %v48, 255
    %v81 = vsel %vm79, 1, 0
    %v82 = vsel %vm80, 1, 0
    %vm83 = vcmp.eq.s32.totalorder %v81, 1
    %vm84 = vcmp.eq.s32.totalorder %v82, 1
    %v85 = vsel %vm83, %v77, 0.0
    %v86 = vsel %vm84, %v78, 0.0
    %v87 = vstv %s45
    %v88 = vmul.f32 %v87, %v85
    %v89 = vmul.f32 %v87, %v86
    %v90 = vadd.f32 %v70, %v88
    %v91 = vadd.f32 %v71, %v89
    %v92 = vrot.slane %v90, 4
    %v93 = vadd.f32 %v90, %v92
    %v94 = vrot.slane %v93, 2
    %v95 = vadd.f32 %v93, %v94
    %v96 = vrot.slane %v95, 1
    %v97 = vadd.f32 %v95, %v96
    %v98 = vrot.slane %v91, 4
    %v99 = vadd.f32 %v91, %v98
    %v100 = vrot.slane %v99, 2
    %v101 = vadd.f32 %v99, %v100
    %v102 = vrot.slane %v101, 1
    %v103 = vadd.f32 %v101, %v102
    %v104 = vrcp.pop 8.0
    %v105 = vmul.f32 %v97, %v104
    %v106 = vmul.f32 %v103, %v104
    %v107 = vsub.f32 %v90, %v105
    %v108 = vsub.f32 %v91, %v106
    %v109 = vmul.f32 %v107, %v107
    %v110 = vmul.f32 %v108, %v108
    %v111 = vrot.slane %v109, 4
    %v112 = vadd.f32 %v109, %v111
    %v113 = vrot.slane %v112, 2
    %v114 = vadd.f32 %v112, %v113
    %v115 = vrot.slane %v114, 1
    %v116 = vadd.f32 %v114, %v115
    %v117 = vrot.slane %v110, 4
    %v118 = vadd.f32 %v110, %v117
    %v119 = vrot.slane %v118, 2
    %v120 = vadd.f32 %v118, %v119
    %v121 = vrot.slane %v120, 1
    %v122 = vadd.f32 %v120, %v121
    %v123 = vmul.f32 %v116, %v104
    %v124 = vmul.f32 %v122, %v104
    %v125 = vadd.f32 %v123, 1e-05
    %v126 = vadd.f32 %v124, 1e-05
    %v127 = vrsqrt.pop %v125
    %v128 = vrsqrt.pop %v126
    %v129 = vld [vmem:[%s2] sm:$0x3]
    %v131 = vlaneseq
    %v132 = vshrl.u32 %v131, 7
    %v133 = vsub.s32 0, %v132
    %v134 = vrot.slane %v129, %v133
    %v135 = vlaneseq
    %v136 = vshrl.u32 %v135, 7
    %v137 = vsub.s32 1, %v136
    %v138 = vrot.slane %v129, %v137
    %v141 = vmul.f32 %v127, %v134
    %v142 = vmul.f32 %v128, %v138
    %v143 = vld [vmem:[%s3] sm:$0x3]
    %v144 = vmul.f32 %v105, %v141
    %v145 = vmul.f32 %v106, %v142
    %v148 = vcombine.low %v144, %v145
    %v150 = vunpack.c.l.s4 1966171168
    %v151 = vunpack.c.0.s8 %v150
    %v152 = vlaneseq
    %v153 = vshrl.u32 %v152, 7
    %v154 = vsub.s32 %v151, %v153
    %v155 = vrot.slane %v148, %v154
    %v157 = vunpack.c.l.s4 1966171168
    %v158 = vunpack.c.0.s8 %v157
    %v159 = vlaneseq
    %v160 = vshrl.u32 %v159, 7
    %v161 = vsub.s32 %v158, %v160
    %v162 = vrot.slane %v155, %v161
    %v164 = vsub.f32 %v143, %v162
    %v165 = vlaneseq
    %v166 = vshrl.u32 %v165, 7
    %v167 = vsub.s32 0, %v166
    %v168 = vrot.slane %v141, %v167
    %v169 = vlaneseq
    %v170 = vshrl.u32 %v169, 7
    %v171 = vsub.s32 0, %v170
    %v172 = vrot.slane %v142, %v171
    %v173 = vmul.f32 %v90, %v168
    %v174 = vmul.f32 %v91, %v172
    %v176 = vlaneseq
    %v177 = vshrl.u32 %v176, 7
    %v178 = vsub.s32 0, %v177
    %v179 = vrot.slane %v164, %v178
    %v180 = vlaneseq
    %v181 = vshrl.u32 %v180, 7
    %v182 = vsub.s32 1, %v181
    %v183 = vrot.slane %v164, %v182
    %v186 = vadd.f32 %v173, %v179
    %v187 = vadd.f32 %v174, %v183
    %188 = vst [vmem:[#allocation7] sm:$0xff] %v186
    %189 = vst [vmem:[#allocation7 + $0x8] sm:$0xff] %v187
    // Predicated region
    $region26: #{tpu_custom_call.1} parent=1 // pred_check
      _
    $region27: #{tpu_custom_call.1} parent=1 // pred_check_branch
      %191 = sbr.rel (0) target = $region29
    $region28: #{tpu_custom_call.1} parent=1 // pred_region
      %s193 = ssub.s32 256, 256
      %194 = vsyncadd [#allocation4], %s193
      %s196 = sshll.u32 [#allocation7], 4
      %s197 = int_to_ptr.vmem [resolvable:$true] %s196
      %199 = dma.vmem_to_hbm [thread:$0]  %s197, 256, %s4, [#allocation4]
    $region29: #{tpu_custom_call.1} parent=1 // pred_fallthru
      _
    // Predicated region
    $region30: #{tpu_custom_call.1} parent=1 // pred_check
      _
    $region31: #{tpu_custom_call.1} parent=1 // pred_check_branch
      %201 = sbr.rel (0) target = $region33
    $region32: #{tpu_custom_call.1} parent=1 // pred_region
      %202 = dma.done [#allocation4], 256
    $region33: #{tpu_custom_call.1} parent=1 // pred_fallthru
      _
    %203 = vsyncpa [#allocation3], 1
    %204 = vsyncpa [#allocation4], 1
    %205 = vsyncpa [#allocation5], 1

</llo_original>
